<compile_context>
chip_gen: v6e
topology: v6e:2x2x1
jax: 0.10.0
libtpu: 0.0.40
codegen_flags: <defaults>
</compile_context>

<pallas_src>
import jax
import jax.numpy as jnp
from jax import lax
from jax.experimental import pallas as pl
from jax.experimental.pallas import tpu as pltpu

HIDDEN_SIZE = 16
INPUT_SIZE = 1
OUTPUT_SIZE = 1


def _rnn_net_kernel(x_ref, h0_ref, p_ref, blin_ref, out_ref, hT_ref, seq_scr):
    """Single-layer tanh RNN + Linear head, fully inside VMEM.

    x_ref   : (B, T, I)      batch-first input (as given by PyTorch)
    h0_ref  : (B, H)         initial hidden state
    p_ref   : (H+I+2, H)     packed params: rows [0:H]=W_hh^T, [H:H+I]=W_ih^T,
                             [H+I]=b_ih+b_hh (fused), [H+I+1]=W_lin row
    blin_ref: (1,)           b_lin scalar (SMEM)
    out_ref : (1, B*T)       head outputs, batch-major row b*T+t (lane-dense row)
    hT_ref  : (B, H)         final hidden state
    seq_scr : (B, T, H)      holds x-projection, overwritten by hidden states
    """
    B, T, I = x_ref.shape
    H = h0_ref.shape[-1]

    # Packed parameter slices (all static, read once).
    whh = p_ref[pl.ds(0, H), :]              # (H, H)  W_hh^T
    wih = p_ref[pl.ds(H, I), :]              # (I, H)  W_ih^T
    bias = p_ref[pl.ds(H + I, 1), :]         # (1, H)  fused b_ih + b_hh
    wlin = p_ref[pl.ds(H + I + 1, 1), :]     # (1, H)  W_lin row

    # Hoisted input projection + fused bias, amortized over all T steps.
    # With I == 1 a K=1 contraction would waste an MXU push/pop, so use a pure
    # VPU broadcast multiply instead.
    if I == 1:
        xproj = x_ref[...] * wih.reshape(1, 1, H) + bias.reshape(1, 1, H)
    else:
        xproj = lax.dot_general(
            x_ref[...], wih,
            dimension_numbers=(((2,), (0,)), ((), ())),
            preferred_element_type=jnp.float32) + bias.reshape(1, 1, H)
    seq_scr[...] = xproj

    h = h0_ref[...]                          # (B, H), carried in vregs
    # T is small & static -> fully unrolled straight-line recurrence with
    # purely static slices.  One MXU matmul per step; no per-step relayout of h.
    # NOTE: each scratch row is read (xp) before it is overwritten (h_t) in the
    # same iteration -- keep that ordering if this loop is restructured.
    # TODO(synk): switch to lax.fori_loop / chunked unroll if T grows large.
    for t in range(T):
        xp = seq_scr[:, pl.ds(t, 1), :].reshape(B, H)    # (B, H)  xproj_t
        h = jnp.tanh(xp + jnp.dot(h, whh, preferred_element_type=jnp.float32))
        seq_scr[:, pl.ds(t, 1), :] = h.reshape(B, 1, H)  # overwrite with h_t

    hT_ref[...] = h

    # Linear head as one matmul producing a (1, B*T) row whose column order is
    # batch-major (b*T + t), i.e. exactly PyTorch's .view(-1, H) on a
    # batch_first output.  No in-kernel transpose, no wrapper permute.
    # TODO(synk): if B*T is scaled up, pad the last dim to a multiple of 128 so
    # this becomes an unmasked lane-dense store.
    seq2d = seq_scr[...].reshape(B * T, H)
    head = lax.dot_general(
        wlin, seq2d,
        dimension_numbers=(((1,), (1,)), ((), ())),
        preferred_element_type=jnp.float32)
    out_ref[...] = head + blin_ref[0]


def net_forward(x, hidden_prev, params):
    """Pallas equivalent of Net.forward(x, hidden_prev)."""
    W_ih, W_hh, b_ih, b_hh, W_lin, b_lin = params
    B, T, I = x.shape
    H = W_hh.shape[0]

    x32 = x.astype(jnp.float32)                               # (B, T, I) as-is
    h0 = hidden_prev[0].astype(jnp.float32)                   # (B, H)

    # One packed parameter block: W_hh^T | W_ih^T | fused bias | W_lin row.
    packed = jnp.concatenate(
        [W_hh.T.astype(jnp.float32),                          # (H, H)
         W_ih.T.astype(jnp.float32),                          # (I, H)
         (b_ih + b_hh).reshape(1, H).astype(jnp.float32),     # (1, H)
         W_lin.reshape(1, H).astype(jnp.float32)],            # (1, H)
        axis=0)                                               # (H+I+2, H)
    blin = b_lin.reshape(1).astype(jnp.float32)               # SMEM scalar

    flops = 2 * T * B * H * (I + H) + 2 * B * T * H
    transcendentals = T * B * H
    bytes_accessed = 4 * (x32.size + h0.size + packed.size + 1 + B * T + B * H)

    # TODO(synk): for B >> 1 add a batch grid axis with
    # dimension_semantics=("parallel",) (buys the second TensorCore on v7x
    # only) and size the per-block scratch / double-buffered inputs against
    # v7x's 64 MiB physical / 32 MiB scoped VMEM (set vmem_limit_bytes).
    call = pl.pallas_call(
        _rnn_net_kernel,
        out_shape=(
            jax.ShapeDtypeStruct((1, B * T), jnp.float32),    # batch-major row
            jax.ShapeDtypeStruct((B, H), jnp.float32),
        ),
        in_specs=[
            pl.BlockSpec(memory_space=pltpu.MemorySpace.VMEM),   # x (B,T,I)
            pl.BlockSpec(memory_space=pltpu.MemorySpace.VMEM),   # h0
            pl.BlockSpec(memory_space=pltpu.MemorySpace.VMEM),   # packed params
            pl.BlockSpec(memory_space=pltpu.MemorySpace.SMEM),   # b_lin scalar
        ],
        out_specs=(
            pl.BlockSpec(memory_space=pltpu.MemorySpace.VMEM),
            pl.BlockSpec(memory_space=pltpu.MemorySpace.VMEM),
        ),
        scratch_shapes=[pltpu.VMEM((B, T, H), jnp.float32)],
        cost_estimate=pl.CostEstimate(
            flops=flops,
            transcendentals=transcendentals,
            bytes_accessed=bytes_accessed),
    )
    out_row, hT = call(x32, h0, packed, blin)

    # (1, B*T) -> (1, B*T, 1): pure reshapes, no permute/copy.
    out = out_row.reshape(B * T, OUTPUT_SIZE)[None, :, :]
    return out, hT[None, :, :]


def ref_forward(x, hidden_prev, params):
    """Pure-JAX reference reproducing PyTorch nn.RNN(batch_first) + Linear."""
    W_ih, W_hh, b_ih, b_hh, W_lin, b_lin = params
    B, T, I = x.shape
    H = W_hh.shape[0]
    h = hidden_prev[0]
    outs = []
    for t in range(T):
        h = jnp.tanh(x[:, t, :] @ W_ih.T + b_ih + h @ W_hh.T + b_hh)
        outs.append(h)
    seq = jnp.stack(outs, axis=1)               # (B, T, H)
    out = seq.reshape(-1, H) @ W_lin.T + b_lin  # (B*T, 1) batch-major rows
    return out[None, :, :], h[None, :, :]


def init_params(key):
    """Deterministic init matching PyTorch shapes (uniform +/- 1/sqrt(H))."""
    H, I, O = HIDDEN_SIZE, INPUT_SIZE, OUTPUT_SIZE
    bound = 1.0 / jnp.sqrt(jnp.float32(H))
    ks = jax.random.split(key, 6)
    W_ih = jax.random.uniform(ks[0], (H, I), jnp.float32, -bound, bound)
    W_hh = jax.random.uniform(ks[1], (H, H), jnp.float32, -bound, bound)
    b_ih = jax.random.uniform(ks[2], (H,), jnp.float32, -bound, bound)
    b_hh = jax.random.uniform(ks[3], (H,), jnp.float32, -bound, bound)
    W_lin = jax.random.uniform(ks[4], (O, H), jnp.float32, -bound, bound)
    b_lin = jax.random.uniform(ks[5], (O,), jnp.float32, -bound, bound)
    return (W_ih, W_hh, b_ih, b_hh, W_lin, b_lin)


if __name__ == "__main__":
    key = jax.random.PRNGKey(0)
    k_params, k_x = jax.random.split(key)

    params = init_params(k_params)

    B, T = 1, 8                                  # batch=1 as in the original script
    x = jax.random.normal(k_x, (B, T, INPUT_SIZE), jnp.float32)
    hidden_prev = jnp.zeros((1, B, HIDDEN_SIZE), jnp.float32)

    out, hidden_out = net_forward(x, hidden_prev, params)
    jax.block_until_ready((out, hidden_out))

    out_ref, hidden_ref = ref_forward(x, hidden_prev, params)
    assert out.shape == (1, B * T, OUTPUT_SIZE)
    assert hidden_out.shape == (1, B, HIDDEN_SIZE)
    assert jnp.allclose(out, out_ref, atol=1e-5, rtol=1e-5)
    assert jnp.allclose(hidden_out, hidden_ref, atol=1e-5, rtol=1e-5)

    print("KERNEL_OK")
</pallas_src>

<mosaic_0001>
module attributes {stable_mosaic.version = 11 : i64} {
  func.func @_rnn_net_kernel(%arg0: memref<1x8x1xf32, #tpu.memory_space<vmem>>, %arg1: memref<1x16xf32, #tpu.memory_space<vmem>>, %arg2: memref<19x16xf32, #tpu.memory_space<vmem>>, %arg3: memref<1xf32, #tpu.memory_space<smem>>, %arg4: memref<1x8xf32, #tpu.memory_space<vmem>>, %arg5: memref<1x16xf32, #tpu.memory_space<vmem>>, %arg6: memref<1x8x16xf32, #tpu.memory_space<vmem>>) attributes {dimension_semantics = [], scalar_prefetch = 0 : i64, scratch_operands = 1 : i64, tpu.core_type = #tpu.core_type<tc>} {
    %c0 = arith.constant 0 : index
    %c0_0 = arith.constant 0 : index
    %0 = vector.load %arg2[%c0, %c0_0] : memref<19x16xf32, #tpu.memory_space<vmem>>, vector<16x16xf32>
    %c16 = arith.constant 16 : index
    %c0_1 = arith.constant 0 : index
    %1 = vector.load %arg2[%c16, %c0_1] : memref<19x16xf32, #tpu.memory_space<vmem>>, vector<1x16xf32>
    %c17 = arith.constant 17 : index
    %c0_2 = arith.constant 0 : index
    %2 = vector.load %arg2[%c17, %c0_2] : memref<19x16xf32, #tpu.memory_space<vmem>>, vector<1x16xf32>
    %c18 = arith.constant 18 : index
    %c0_3 = arith.constant 0 : index
    %3 = vector.load %arg2[%c18, %c0_3] : memref<19x16xf32, #tpu.memory_space<vmem>>, vector<1x16xf32>
    %c0_4 = arith.constant 0 : index
    %c0_5 = arith.constant 0 : index
    %c0_6 = arith.constant 0 : index
    %4 = vector.load %arg0[%c0_4, %c0_5, %c0_6] : memref<1x8x1xf32, #tpu.memory_space<vmem>>, vector<1x8x1xf32>
    %5 = vector.shape_cast %1 : vector<1x16xf32> to vector<1x1x16xf32>
    %6 = vector.broadcast %4 : vector<1x8x1xf32> to vector<1x8x16xf32>
    %7 = vector.broadcast %5 : vector<1x1x16xf32> to vector<1x8x16xf32>
    %8 = arith.mulf %6, %7 : vector<1x8x16xf32>
    %9 = vector.shape_cast %2 : vector<1x16xf32> to vector<1x1x16xf32>
    %10 = vector.broadcast %9 : vector<1x1x16xf32> to vector<1x8x16xf32>
    %11 = arith.addf %8, %10 : vector<1x8x16xf32>
    %c0_7 = arith.constant 0 : index
    %c0_8 = arith.constant 0 : index
    %c0_9 = arith.constant 0 : index
    %12 = vector.load %arg6[%c0_7, %c0_8, %c0_9] : memref<1x8x16xf32, #tpu.memory_space<vmem>>, vector<1x8x16xf32>
    tpu.vector_store %arg6[%c0_7, %c0_8, %c0_9], %11 {strides = array<i32>} : memref<1x8x16xf32, #tpu.memory_space<vmem>>, vector<1x8x16xf32>,
    %c0_10 = arith.constant 0 : index
    %c0_11 = arith.constant 0 : index
    %13 = vector.load %arg1[%c0_10, %c0_11] : memref<1x16xf32, #tpu.memory_space<vmem>>, vector<1x16xf32>
    %c0_12 = arith.constant 0 : index
    %c0_13 = arith.constant 0 : index
    %c0_14 = arith.constant 0 : index
    %14 = vector.load %arg6[%c0_12, %c0_13, %c0_14] : memref<1x8x16xf32, #tpu.memory_space<vmem>>, vector<1x1x16xf32>
    %15 = vector.shape_cast %14 : vector<1x1x16xf32> to vector<1x16xf32>
    %cst = arith.constant dense<0.000000e+00> : vector<1x16xf32>
    %16 = tpu.matmul %13, %0, %cst {dimension_numbers = #tpu.dot_dimension_numbers<[1], [0], [0], [1], [0, 0, 1, 1], [], []>} : vector<1x16xf32>, vector<16x16xf32>, vector<1x16xf32> -> vector<1x16xf32>
    %17 = arith.addf %15, %16 : vector<1x16xf32>
    %18 = math.tanh %17 : vector<1x16xf32>
    %19 = vector.shape_cast %18 : vector<1x16xf32> to vector<1x1x16xf32>
    %c0_15 = arith.constant 0 : index
    %c0_16 = arith.constant 0 : index
    %c0_17 = arith.constant 0 : index
    %20 = vector.load %arg6[%c0_15, %c0_16, %c0_17] : memref<1x8x16xf32, #tpu.memory_space<vmem>>, vector<1x1x16xf32>
    tpu.vector_store %arg6[%c0_15, %c0_16, %c0_17], %19 {strides = array<i32>} : memref<1x8x16xf32, #tpu.memory_space<vmem>>, vector<1x1x16xf32>,
    %c0_18 = arith.constant 0 : index
    %c1 = arith.constant 1 : index
    %c0_19 = arith.constant 0 : index
    %21 = vector.load %arg6[%c0_18, %c1, %c0_19] : memref<1x8x16xf32, #tpu.memory_space<vmem>>, vector<1x1x16xf32>
    %22 = vector.shape_cast %21 : vector<1x1x16xf32> to vector<1x16xf32>
    %cst_20 = arith.constant dense<0.000000e+00> : vector<1x16xf32>
    %23 = tpu.matmul %18, %0, %cst_20 {dimension_numbers = #tpu.dot_dimension_numbers<[1], [0], [0], [1], [0, 0, 1, 1], [], []>} : vector<1x16xf32>, vector<16x16xf32>, vector<1x16xf32> -> vector<1x16xf32>
    %24 = arith.addf %22, %23 : vector<1x16xf32>
    %25 = math.tanh %24 : vector<1x16xf32>
    %26 = vector.shape_cast %25 : vector<1x16xf32> to vector<1x1x16xf32>
    %c0_21 = arith.constant 0 : index
    %c1_22 = arith.constant 1 : index
    %c0_23 = arith.constant 0 : index
    %27 = vector.load %arg6[%c0_21, %c1_22, %c0_23] : memref<1x8x16xf32, #tpu.memory_space<vmem>>, vector<1x1x16xf32>
    tpu.vector_store %arg6[%c0_21, %c1_22, %c0_23], %26 {strides = array<i32>} : memref<1x8x16xf32, #tpu.memory_space<vmem>>, vector<1x1x16xf32>,
    %c0_24 = arith.constant 0 : index
    %c2 = arith.constant 2 : index
    %c0_25 = arith.constant 0 : index
    %28 = vector.load %arg6[%c0_24, %c2, %c0_25] : memref<1x8x16xf32, #tpu.memory_space<vmem>>, vector<1x1x16xf32>
    %29 = vector.shape_cast %28 : vector<1x1x16xf32> to vector<1x16xf32>
    %cst_26 = arith.constant dense<0.000000e+00> : vector<1x16xf32>
    %30 = tpu.matmul %25, %0, %cst_26 {dimension_numbers = #tpu.dot_dimension_numbers<[1], [0], [0], [1], [0, 0, 1, 1], [], []>} : vector<1x16xf32>, vector<16x16xf32>, vector<1x16xf32> -> vector<1x16xf32>
    %31 = arith.addf %29, %30 : vector<1x16xf32>
    %32 = math.tanh %31 : vector<1x16xf32>
    %33 = vector.shape_cast %32 : vector<1x16xf32> to vector<1x1x16xf32>
    %c0_27 = arith.constant 0 : index
    %c2_28 = arith.constant 2 : index
    %c0_29 = arith.constant 0 : index
    %34 = vector.load %arg6[%c0_27, %c2_28, %c0_29] : memref<1x8x16xf32, #tpu.memory_space<vmem>>, vector<1x1x16xf32>
    tpu.vector_store %arg6[%c0_27, %c2_28, %c0_29], %33 {strides = array<i32>} : memref<1x8x16xf32, #tpu.memory_space<vmem>>, vector<1x1x16xf32>,
    %c0_30 = arith.constant 0 : index
    %c3 = arith.constant 3 : index
    %c0_31 = arith.constant 0 : index
    %35 = vector.load %arg6[%c0_30, %c3, %c0_31] : memref<1x8x16xf32, #tpu.memory_space<vmem>>, vector<1x1x16xf32>
    %36 = vector.shape_cast %35 : vector<1x1x16xf32> to vector<1x16xf32>
    %cst_32 = arith.constant dense<0.000000e+00> : vector<1x16xf32>
    %37 = tpu.matmul %32, %0, %cst_32 {dimension_numbers = #tpu.dot_dimension_numbers<[1], [0], [0], [1], [0, 0, 1, 1], [], []>} : vector<1x16xf32>, vector<16x16xf32>, vector<1x16xf32> -> vector<1x16xf32>
    %38 = arith.addf %36, %37 : vector<1x16xf32>
    %39 = math.tanh %38 : vector<1x16xf32>
    %40 = vector.shape_cast %39 : vector<1x16xf32> to vector<1x1x16xf32>
    %c0_33 = arith.constant 0 : index
    %c3_34 = arith.constant 3 : index
    %c0_35 = arith.constant 0 : index
    %41 = vector.load %arg6[%c0_33, %c3_34, %c0_35] : memref<1x8x16xf32, #tpu.memory_space<vmem>>, vector<1x1x16xf32>
    tpu.vector_store %arg6[%c0_33, %c3_34, %c0_35], %40 {strides = array<i32>} : memref<1x8x16xf32, #tpu.memory_space<vmem>>, vector<1x1x16xf32>,
    %c0_36 = arith.constant 0 : index
    %c4 = arith.constant 4 : index
    %c0_37 = arith.constant 0 : index
    %42 = vector.load %arg6[%c0_36, %c4, %c0_37] : memref<1x8x16xf32, #tpu.memory_space<vmem>>, vector<1x1x16xf32>
    %43 = vector.shape_cast %42 : vector<1x1x16xf32> to vector<1x16xf32>
    %cst_38 = arith.constant dense<0.000000e+00> : vector<1x16xf32>
    %44 = tpu.matmul %39, %0, %cst_38 {dimension_numbers = #tpu.dot_dimension_numbers<[1], [0], [0], [1], [0, 0, 1, 1], [], []>} : vector<1x16xf32>, vector<16x16xf32>, vector<1x16xf32> -> vector<1x16xf32>
    %45 = arith.addf %43, %44 : vector<1x16xf32>
    %46 = math.tanh %45 : vector<1x16xf32>
    %47 = vector.shape_cast %46 : vector<1x16xf32> to vector<1x1x16xf32>
    %c0_39 = arith.constant 0 : index
    %c4_40 = arith.constant 4 : index
    %c0_41 = arith.constant 0 : index
    %48 = vector.load %arg6[%c0_39, %c4_40, %c0_41] : memref<1x8x16xf32, #tpu.memory_space<vmem>>, vector<1x1x16xf32>
    tpu.vector_store %arg6[%c0_39, %c4_40, %c0_41], %47 {strides = array<i32>} : memref<1x8x16xf32, #tpu.memory_space<vmem>>, vector<1x1x16xf32>,
    %c0_42 = arith.constant 0 : index
    %c5 = arith.constant 5 : index
    %c0_43 = arith.constant 0 : index
    %49 = vector.load %arg6[%c0_42, %c5, %c0_43] : memref<1x8x16xf32, #tpu.memory_space<vmem>>, vector<1x1x16xf32>
    %50 = vector.shape_cast %49 : vector<1x1x16xf32> to vector<1x16xf32>
    %cst_44 = arith.constant dense<0.000000e+00> : vector<1x16xf32>
    %51 = tpu.matmul %46, %0, %cst_44 {dimension_numbers = #tpu.dot_dimension_numbers<[1], [0], [0], [1], [0, 0, 1, 1], [], []>} : vector<1x16xf32>, vector<16x16xf32>, vector<1x16xf32> -> vector<1x16xf32>
    %52 = arith.addf %50, %51 : vector<1x16xf32>
    %53 = math.tanh %52 : vector<1x16xf32>
    %54 = vector.shape_cast %53 : vector<1x16xf32> to vector<1x1x16xf32>
    %c0_45 = arith.constant 0 : index
    %c5_46 = arith.constant 5 : index
    %c0_47 = arith.constant 0 : index
    %55 = vector.load %arg6[%c0_45, %c5_46, %c0_47] : memref<1x8x16xf32, #tpu.memory_space<vmem>>, vector<1x1x16xf32>
    tpu.vector_store %arg6[%c0_45, %c5_46, %c0_47], %54 {strides = array<i32>} : memref<1x8x16xf32, #tpu.memory_space<vmem>>, vector<1x1x16xf32>,
    %c0_48 = arith.constant 0 : index
    %c6 = arith.constant 6 : index
    %c0_49 = arith.constant 0 : index
    %56 = vector.load %arg6[%c0_48, %c6, %c0_49] : memref<1x8x16xf32, #tpu.memory_space<vmem>>, vector<1x1x16xf32>
    %57 = vector.shape_cast %56 : vector<1x1x16xf32> to vector<1x16xf32>
    %cst_50 = arith.constant dense<0.000000e+00> : vector<1x16xf32>
    %58 = tpu.matmul %53, %0, %cst_50 {dimension_numbers = #tpu.dot_dimension_numbers<[1], [0], [0], [1], [0, 0, 1, 1], [], []>} : vector<1x16xf32>, vector<16x16xf32>, vector<1x16xf32> -> vector<1x16xf32>
    %59 = arith.addf %57, %58 : vector<1x16xf32>
    %60 = math.tanh %59 : vector<1x16xf32>
    %61 = vector.shape_cast %60 : vector<1x16xf32> to vector<1x1x16xf32>
    %c0_51 = arith.constant 0 : index
    %c6_52 = arith.constant 6 : index
    %c0_53 = arith.constant 0 : index
    %62 = vector.load %arg6[%c0_51, %c6_52, %c0_53] : memref<1x8x16xf32, #tpu.memory_space<vmem>>, vector<1x1x16xf32>
    tpu.vector_store %arg6[%c0_51, %c6_52, %c0_53], %61 {strides = array<i32>} : memref<1x8x16xf32, #tpu.memory_space<vmem>>, vector<1x1x16xf32>,
    %c0_54 = arith.constant 0 : index
    %c7 = arith.constant 7 : index
    %c0_55 = arith.constant 0 : index
    %63 = vector.load %arg6[%c0_54, %c7, %c0_55] : memref<1x8x16xf32, #tpu.memory_space<vmem>>, vector<1x1x16xf32>
    %64 = vector.shape_cast %63 : vector<1x1x16xf32> to vector<1x16xf32>
    %cst_56 = arith.constant dense<0.000000e+00> : vector<1x16xf32>
    %65 = tpu.matmul %60, %0, %cst_56 {dimension_numbers = #tpu.dot_dimension_numbers<[1], [0], [0], [1], [0, 0, 1, 1], [], []>} : vector<1x16xf32>, vector<16x16xf32>, vector<1x16xf32> -> vector<1x16xf32>
    %66 = arith.addf %64, %65 : vector<1x16xf32>
    %67 = math.tanh %66 : vector<1x16xf32>
    %68 = vector.shape_cast %67 : vector<1x16xf32> to vector<1x1x16xf32>
    %c0_57 = arith.constant 0 : index
    %c7_58 = arith.constant 7 : index
    %c0_59 = arith.constant 0 : index
    %69 = vector.load %arg6[%c0_57, %c7_58, %c0_59] : memref<1x8x16xf32, #tpu.memory_space<vmem>>, vector<1x1x16xf32>
    tpu.vector_store %arg6[%c0_57, %c7_58, %c0_59], %68 {strides = array<i32>} : memref<1x8x16xf32, #tpu.memory_space<vmem>>, vector<1x1x16xf32>,
    %c0_60 = arith.constant 0 : index
    %c0_61 = arith.constant 0 : index
    %70 = vector.load %arg5[%c0_60, %c0_61] : memref<1x16xf32, #tpu.memory_space<vmem>>, vector<1x16xf32>
    tpu.vector_store %arg5[%c0_60, %c0_61], %67 {strides = array<i32>} : memref<1x16xf32, #tpu.memory_space<vmem>>, vector<1x16xf32>,
    %c0_62 = arith.constant 0 : index
    %c0_63 = arith.constant 0 : index
    %c0_64 = arith.constant 0 : index
    %71 = vector.load %arg6[%c0_62, %c0_63, %c0_64] : memref<1x8x16xf32, #tpu.memory_space<vmem>>, vector<1x8x16xf32>
    %72 = vector.shape_cast %71 : vector<1x8x16xf32> to vector<8x16xf32>
    %cst_65 = arith.constant dense<0.000000e+00> : vector<1x8xf32>
    %73 = tpu.matmul %3, %72, %cst_65 {dimension_numbers = #tpu.dot_dimension_numbers<[1], [1], [0], [0], [0, 0, 1, 0], [], []>} : vector<1x16xf32>, vector<8x16xf32>, vector<1x8xf32> -> vector<1x8xf32>
    %c0_66 = arith.constant 0 : index
    %74 = memref.load %arg3[%c0_66] : memref<1xf32, #tpu.memory_space<smem>>
    %75 = vector.broadcast %74 : f32 to vector<1x8xf32>
    %76 = arith.addf %73, %75 : vector<1x8xf32>
    %c0_67 = arith.constant 0 : index
    %c0_68 = arith.constant 0 : index
    %77 = vector.load %arg4[%c0_67, %c0_68] : memref<1x8xf32, #tpu.memory_space<vmem>>, vector<1x8xf32>
    tpu.vector_store %arg4[%c0_67, %c0_68], %76 {strides = array<i32>} : memref<1x8xf32, #tpu.memory_space<vmem>>, vector<1x8xf32>,
    return
  }
}

</mosaic_0001>

<llo_original>
// kernel: tpu_custom_call.1
$region0: #{tpu_custom_call.1}
  #allocation0 [shape = 'u32[]', space=smem, size = 0x4, offset = 0x4, fixed_abs, tag = 'smem constant byte address 0x4 - core index']
  #allocation1 [shape = 'u32[144,128]{1,0:T(1,128)}', space=vmem, size = 0x12000, scoped, tag = 'internal scratch']
  #allocation2 [shape = 'f32[1,8,16]{2,1,0:T(8,128)}', space=vmem, size = 0x1000, scoped, tag = 'scratch operand']
  #allocation3 [shape = 'f32[1]{0:T(128)S(6)}', space=smem, size = 0x200, scoped, tag = 'scoped memory for tpu_custom_call.1']
  %s0 = inlined_call_operand.vmem [shape: f32[1,8,1], index: 0, kind: input, shape index: {}]
  %s1 = inlined_call_operand.vmem [shape: f32[1,16], index: 1, kind: input, shape index: {}]
  %s2 = inlined_call_operand.vmem [shape: f32[19,16], index: 2, kind: input, shape index: {}]
  %s3 = inlined_call_operand.<no memory space> [shape: f32[1], index: 3, kind: input, shape index: {}]
  %s4 = inlined_call_operand.hbm [shape: f32[1,8], index: 4, kind: output, shape index: {0}]
  %s5 = inlined_call_operand.hbm [shape: f32[1,16], index: 5, kind: output, shape index: {1}]
  %6 = xla_tuple %s4, %s5
  %s7 = sld [smem:[#allocation0]]
  $region34: #{tpu_custom_call.1} parent=0
    _
  %s9 = ssub.s32 1, %s7
  %s10 = scalar_select 0, %s9, %s7
  %11 = sst [smem:[#allocation3]] %s3
  $region1: #{tpu_custom_call.1} parent=0
    #allocation4 [shape = 'u8[512]{0}', space=vmem, size = 0x400, scoped, tag = 'output window, operand 0, single buffered']
    #allocation5 [shape = 's32[1]{0}', space=sflag, size = 0x4, scoped, tag = 'scoped memory for tpu_custom_call.1']
    #allocation6 [shape = 'u8[512]{0}', space=vmem, size = 0x400, scoped, tag = 'output window, operand 1, single buffered']
    #allocation7 [shape = 's32[1]{0}', space=sflag, size = 0x4, scoped, tag = 'scoped memory for tpu_custom_call.1']
    %12 = vsyncpa [#allocation5], 0
    %13 = vsyncpa [#allocation7], 0
    // Predicated region
    $region2: #{tpu_custom_call.1} parent=1 // pred_check
      _
    $region3: #{tpu_custom_call.1} parent=1 // pred_check_branch
      %15 = sbr.rel (0) target = $region5
    $region4: #{tpu_custom_call.1} parent=1 // pred_region
      _
    $region5: #{tpu_custom_call.1} parent=1 // pred_fallthru
      _
    // Predicated region
    $region6: #{tpu_custom_call.1} parent=1 // pred_check
      _
    $region7: #{tpu_custom_call.1} parent=1 // pred_check_branch
      %17 = sbr.rel (0) target = $region9
    $region8: #{tpu_custom_call.1} parent=1 // pred_region
      _
    $region9: #{tpu_custom_call.1} parent=1 // pred_fallthru
      _
    // Predicated region
    $region10: #{tpu_custom_call.1} parent=1 // pred_check
      _
    $region11: #{tpu_custom_call.1} parent=1 // pred_check_branch
      %19 = sbr.rel (0) target = $region13
    $region12: #{tpu_custom_call.1} parent=1 // pred_region
      _
    $region13: #{tpu_custom_call.1} parent=1 // pred_fallthru
      _
    // Predicated region
    $region14: #{tpu_custom_call.1} parent=1 // pred_check
      _
    $region15: #{tpu_custom_call.1} parent=1 // pred_check_branch
      %21 = sbr.rel (0) target = $region17
    $region16: #{tpu_custom_call.1} parent=1 // pred_region
      _
    $region17: #{tpu_custom_call.1} parent=1 // pred_fallthru
      _
    %v22 = vld [vmem:[%s2] sm:$0xff]
    %v23 = vld [vmem:[%s2 + $0x8] sm:$0xff]
    %v24 = vld [vmem:[%s2 + $0x10] sm:$0x1]
    %v25 = vld [vmem:[%s2 + $0x11] sm:$0x1]
    %v26 = vld [vmem:[%s2 + $0x12] sm:$0x1]
    %v27 = vld [vmem:[%s0] sm:$0xff]
    %29 = vset.pattern.permute.xlu0 0
    %30 = vperm.xlu0 %29, %v27
    %v31 = vpop.permute.xlu0 %30
    %v33 = vlaneseq
    %v34 = vshrl.u32 %v33, 7
    %v35 = vsub.s32 0, %v34
    %v36 = vrot.slane %v24, %v35
    %v37 = vmul.f32 %v31, %v36
    %v38 = vlaneseq
    %v39 = vshrl.u32 %v38, 7
    %v40 = vsub.s32 0, %v39
    %v41 = vrot.slane %v25, %v40
    %v42 = vadd.f32 %v37, %v41
    %vm43 = vcmask 130048
    %44 = vst.msk [vmem:[#allocation2] sm:$0xff] %vm43, %v42
    %v45 = vld [vmem:[%s1] sm:$0x1]
    %v46 = vld [vmem:[#allocation2] sm:$0x1]
    %v48 = vsel %vm43, %v45, 0
    %50 = vmatprep.subr.mxu0 0.0
    %51 = vmatpush1.msra.mxu0 0.0
    %52 = vmatprep.subr.mxu0 0.0
    %53 = vmatpush1.msra.mxu0 0.0
    %54 = vmatprep.subr.mxu0 0.0
    %55 = vmatpush1.msra.mxu0 0.0
    %56 = vmatprep.subr.mxu0 0.0
    %57 = vmatpush1.msra.mxu0 0.0
    %58 = vmatprep.subr.mxu0 0.0
    %59 = vmatpush1.msra.mxu0 0.0
    %60 = vmatprep.subr.mxu0 0.0
    %61 = vmatpush1.msra.mxu0 0.0
    %62 = vmatprep.subr.mxu0 0.0
    %63 = vmatpush1.msra.mxu0 0.0
    %64 = vmatprep.subr.mxu0 0.0
    %65 = vmatpush1.msra.mxu0 0.0
    %66 = vmatprep.subr.mxu0 0.0
    %67 = vmatpush1.msra.mxu0 0.0
    %68 = vmatprep.subr.mxu0 0.0
    %69 = vmatpush1.msra.mxu0 0.0
    %70 = vmatprep.subr.mxu0 0.0
    %71 = vmatpush1.msra.mxu0 0.0
    %72 = vmatprep.subr.mxu0 0.0
    %73 = vmatpush1.msra.mxu0 0.0
    %74 = vmatprep.subr.mxu0 0.0
    %75 = vmatpush1.msra.mxu0 0.0
    %76 = vmatprep.subr.mxu0 0.0
    %77 = vmatpush1.msra.mxu0 0.0
    %78 = vmatprep.subr.mxu0 0.0
    %79 = vmatpush1.msra.mxu0 %v23
    %80 = vmatprep.subr.mxu0 0.0
    %81 = vmatpush1.msra.mxu0 %v22
    %82 = vmatprep.subr.mxu0 0.0
    %83 = vmatpush2.msra.mxu0 0.0
    %84 = vmatprep.subr.mxu0 0.0
    %85 = vmatpush2.msra.mxu0 0.0
    %86 = vmatprep.subr.mxu0 0.0
    %87 = vmatpush2.msra.mxu0 0.0
    %88 = vmatprep.subr.mxu0 0.0
    %89 = vmatpush2.msra.mxu0 0.0
    %90 = vmatprep.subr.mxu0 0.0
    %91 = vmatpush2.msra.mxu0 0.0
    %92 = vmatprep.subr.mxu0 0.0
    %93 = vmatpush2.msra.mxu0 0.0
    %94 = vmatprep.subr.mxu0 0.0
    %95 = vmatpush2.msra.mxu0 0.0
    %96 = vmatprep.subr.mxu0 0.0
    %97 = vmatpush2.msra.mxu0 0.0
    %98 = vmatprep.subr.mxu0 0.0
    %99 = vmatpush2.msra.mxu0 0.0
    %100 = vmatprep.subr.mxu0 0.0
    %101 = vmatpush2.msra.mxu0 0.0
    %102 = vmatprep.subr.mxu0 0.0
    %103 = vmatpush2.msra.mxu0 0.0
    %104 = vmatprep.subr.mxu0 0.0
    %105 = vmatpush2.msra.mxu0 0.0
    %106 = vmatprep.subr.mxu0 0.0
    %107 = vmatpush2.msra.mxu0 0.0
    %108 = vmatprep.subr.mxu0 0.0
    %109 = vmatpush2.msra.mxu0 0.0
    %110 = vmatprep.subr.mxu0 0.0
    %111 = vmatpush2.msra.mxu0 0.0
    %112 = vmatprep.subr.mxu0 0.0
    %113 = vmatpush2.msra.mxu0 0.0
    %114 = vmatprep.mubr.f32.mxu0 0.0
    %115 = vmatmul.mubr.f32.gmra.mxu0 %v48
    %v116 = vpop.f32.mrf.mxu0
    %v117 = vadd.f32 0.0, %v116
    %v118 = vpop.f32.mrf.mxu0
    %119 = vdwg.mxu0
    %v120 = vadd.f32 %v46, %v117
    %v121 = vtanh.pop %v120
    %vm122 = vcmask 122880
    %123 = vst.msk [vmem:[#allocation2] sm:$0x1] %vm122, %v121
    %v124 = vld [vmem:[#allocation2 + $0x1] sm:$0x1]
    %v126 = vsel %vm43, %v121, 0
    %128 = vmatprep.subr.mxu0 0.0
    %129 = vmatpush1.msra.mxu0 0.0
    %130 = vmatprep.subr.mxu0 0.0
    %131 = vmatpush1.msra.mxu0 0.0
    %132 = vmatprep.subr.mxu0 0.0
    %133 = vmatpush1.msra.mxu0 0.0
    %134 = vmatprep.subr.mxu0 0.0
    %135 = vmatpush1.msra.mxu0 0.0
    %136 = vmatprep.subr.mxu0 0.0
    %137 = vmatpush1.msra.mxu0 0.0
    %138 = vmatprep.subr.mxu0 0.0
    %139 = vmatpush1.msra.mxu0 0.0
    %140 = vmatprep.subr.mxu0 0.0
    %141 = vmatpush1.msra.mxu0 0.0
    %142 = vmatprep.subr.mxu0 0.0
    %143 = vmatpush1.msra.mxu0 0.0
    %144 = vmatprep.subr.mxu0 0.0
    %145 = vmatpush1.msra.mxu0 0.0
    %146 = vmatprep.subr.mxu0 0.0
    %147 = vmatpush1.msra.mxu0 0.0
    %148 = vmatprep.subr.mxu0 0.0
    %149 = vmatpush1.msra.mxu0 0.0
    %150 = vmatprep.subr.mxu0 0.0
    %151 = vmatpush1.msra.mxu0 0.0
    %152 = vmatprep.subr.mxu0 0.0
    %153 = vmatpush1.msra.mxu0 0.0
    %154 = vmatprep.subr.mxu0 0.0
    %155 = vmatpush1.msra.mxu0 0.0
    %156 = vmatprep.subr.mxu0 0.0
    %157 = vmatpush1.msra.mxu0 %v23
    %158 = vmatprep.subr.mxu0 0.0
    %159 = vmatpush1.msra.mxu0 %v22
    %160 = vmatprep.subr.mxu0 0.0
    %161 = vmatpush2.msra.mxu0 0.0
    %162 = vmatprep.subr.mxu0 0.0
    %163 = vmatpush2.msra.mxu0 0.0
    %164 = vmatprep.subr.mxu0 0.0
    %165 = vmatpush2.msra.mxu0 0.0
    %166 = vmatprep.subr.mxu0 0.0
    %167 = vmatpush2.msra.mxu0 0.0
    %168 = vmatprep.subr.mxu0 0.0
    %169 = vmatpush2.msra.mxu0 0.0
    %170 = vmatprep.subr.mxu0 0.0
    %171 = vmatpush2.msra.mxu0 0.0
    %172 = vmatprep.subr.mxu0 0.0
    %173 = vmatpush2.msra.mxu0 0.0
    %174 = vmatprep.subr.mxu0 0.0
    %175 = vmatpush2.msra.mxu0 0.0
    %176 = vmatprep.subr.mxu0 0.0
    %177 = vmatpush2.msra.mxu0 0.0
    %178 = vmatprep.subr.mxu0 0.0
    %179 = vmatpush2.msra.mxu0 0.0
    %180 = vmatprep.subr.mxu0 0.0
    %181 = vmatpush2.msra.mxu0 0.0
    %182 = vmatprep.subr.mxu0 0.0
    %183 = vmatpush2.msra.mxu0 0.0
    %184 = vmatprep.subr.mxu0 0.0
    %185 = vmatpush2.msra.mxu0 0.0
    %186 = vmatprep.subr.mxu0 0.0
    %187 = vmatpush2.msra.mxu0 0.0
    %188 = vmatprep.subr.mxu0 0.0
    %189 = vmatpush2.msra.mxu0 0.0
    %190 = vmatprep.subr.mxu0 0.0
    %191 = vmatpush2.msra.mxu0 0.0
    %192 = vmatprep.mubr.f32.mxu0 0.0
    %193 = vmatmul.mubr.f32.gmra.mxu0 %v126
    %v194 = vpop.f32.mrf.mxu0
    %v195 = vadd.f32 0.0, %v194
    %v196 = vpop.f32.mrf.mxu0
    %197 = vdwg.mxu0
    %v198 = vadd.f32 %v124, %v195
    %v199 = vtanh.pop %v198
    %200 = vst.msk [vmem:[#allocation2 + $0x1] sm:$0x1] %vm122, %v199
    %v201 = vld [vmem:[#allocation2 + $0x2] sm:$0x1]
    %v203 = vsel %vm43, %v199, 0
    %205 = vmatprep.subr.mxu0 0.0
    %206 = vmatpush1.msra.mxu0 0.0
    %207 = vmatprep.subr.mxu0 0.0
    %208 = vmatpush1.msra.mxu0 0.0
    %209 = vmatprep.subr.mxu0 0.0
    %210 = vmatpush1.msra.mxu0 0.0
    %211 = vmatprep.subr.mxu0 0.0
    %212 = vmatpush1.msra.mxu0 0.0
    %213 = vmatprep.subr.mxu0 0.0
    %214 = vmatpush1.msra.mxu0 0.0
    %215 = vmatprep.subr.mxu0 0.0
    %216 = vmatpush1.msra.mxu0 0.0
    %217 = vmatprep.subr.mxu0 0.0
    %218 = vmatpush1.msra.mxu0 0.0
    %219 = vmatprep.subr.mxu0 0.0
    %220 = vmatpush1.msra.mxu0 0.0
    %221 = vmatprep.subr.mxu0 0.0
    %222 = vmatpush1.msra.mxu0 0.0
    %223 = vmatprep.subr.mxu0 0.0
    %224 = vmatpush1.msra.mxu0 0.0
    %225 = vmatprep.subr.mxu0 0.0
    %226 = vmatpush1.msra.mxu0 0.0
    %227 = vmatprep.subr.mxu0 0.0
    %228 = vmatpush1.msra.mxu0 0.0
    %229 = vmatprep.subr.mxu0 0.0
    %230 = vmatpush1.msra.mxu0 0.0
    %231 = vmatprep.subr.mxu0 0.0
    %232 = vmatpush1.msra.mxu0 0.0
    %233 = vmatprep.subr.mxu0 0.0
    %234 = vmatpush1.msra.mxu0 %v23
    %235 = vmatprep.subr.mxu0 0.0
    %236 = vmatpush1.msra.mxu0 %v22
    %237 = vmatprep.subr.mxu0 0.0
    %238 = vmatpush2.msra.mxu0 0.0
    %239 = vmatprep.subr.mxu0 0.0
    %240 = vmatpush2.msra.mxu0 0.0
    %241 = vmatprep.subr.mxu0 0.0
    %242 = vmatpush2.msra.mxu0 0.0
    %243 = vmatprep.subr.mxu0 0.0
    %244 = vmatpush2.msra.mxu0 0.0
    %245 = vmatprep.subr.mxu0 0.0
    %246 = vmatpush2.msra.mxu0 0.0
    %247 = vmatprep.subr.mxu0 0.0
    %248 = vmatpush2.msra.mxu0 0.0
    %249 = vmatprep.subr.mxu0 0.0
    %250 = vmatpush2.msra.mxu0 0.0
    %251 = vmatprep.subr.mxu0 0.0
    %252 = vmatpush2.msra.mxu0 0.0
    %253 = vmatprep.subr.mxu0 0.0
    %254 = vmatpush2.msra.mxu0 0.0
    %255 = vmatprep.subr.mxu0 0.0
    %256 = vmatpush2.msra.mxu0 0.0
    %257 = vmatprep.subr.mxu0 0.0
    %258 = vmatpush2.msra.mxu0 0.0
    %259 = vmatprep.subr.mxu0 0.0
    %260 = vmatpush2.msra.mxu0 0.0
    %261 = vmatprep.subr.mxu0 0.0
    %262 = vmatpush2.msra.mxu0 0.0
    %263 = vmatprep.subr.mxu0 0.0
    %264 = vmatpush2.msra.mxu0 0.0
    %265 = vmatprep.subr.mxu0 0.0
    %266 = vmatpush2.msra.mxu0 0.0
    %267 = vmatprep.subr.mxu0 0.0
    %268 = vmatpush2.msra.mxu0 0.0
    %269 = vmatprep.mubr.f32.mxu0 0.0
    %270 = vmatmul.mubr.f32.gmra.mxu0 %v203
    %v271 = vpop.f32.mrf.mxu0
    %v272 = vadd.f32 0.0, %v271
    %v273 = vpop.f32.mrf.mxu0
    %274 = vdwg.mxu0
    %v275 = vadd.f32 %v201, %v272
    %v276 = vtanh.pop %v275
    %277 = vst.msk [vmem:[#allocation2 + $0x2] sm:$0x1] %vm122, %v276
    %v278 = vld [vmem:[#allocation2 + $0x3] sm:$0x1]
    %v280 = vsel %vm43, %v276, 0
    %282 = vmatprep.subr.mxu0 0.0
    %283 = vmatpush1.msra.mxu0 0.0
    %284 = vmatprep.subr.mxu0 0.0
    %285 = vmatpush1.msra.mxu0 0.0
    %286 = vmatprep.subr.mxu0 0.0
    %287 = vmatpush1.msra.mxu0 0.0
    %288 = vmatprep.subr.mxu0 0.0
    %289 = vmatpush1.msra.mxu0 0.0
    %290 = vmatprep.subr.mxu0 0.0
    %291 = vmatpush1.msra.mxu0 0.0
    %292 = vmatprep.subr.mxu0 0.0
    %293 = vmatpush1.msra.mxu0 0.0
    %294 = vmatprep.subr.mxu0 0.0
    %295 = vmatpush1.msra.mxu0 0.0
    %296 = vmatprep.subr.mxu0 0.0
    %297 = vmatpush1.msra.mxu0 0.0
    %298 = vmatprep.subr.mxu0 0.0
    %299 = vmatpush1.msra.mxu0 0.0
    %300 = vmatprep.subr.mxu0 0.0
    %301 = vmatpush1.msra.mxu0 0.0
    %302 = vmatprep.subr.mxu0 0.0
    %303 = vmatpush1.msra.mxu0 0.0
    %304 = vmatprep.subr.mxu0 0.0
    %305 = vmatpush1.msra.mxu0 0.0
    %306 = vmatprep.subr.mxu0 0.0
    %307 = vmatpush1.msra.mxu0 0.0
    %308 = vmatprep.subr.mxu0 0.0
    %309 = vmatpush1.msra.mxu0 0.0
    %310 = vmatprep.subr.mxu0 0.0
    %311 = vmatpush1.msra.mxu0 %v23
    %312 = vmatprep.subr.mxu0 0.0
    %313 = vmatpush1.msra.mxu0 %v22
    %314 = vmatprep.subr.mxu0 0.0
    %315 = vmatpush2.msra.mxu0 0.0
    %316 = vmatprep.subr.mxu0 0.0
    %317 = vmatpush2.msra.mxu0 0.0
    %318 = vmatprep.subr.mxu0 0.0
    %319 = vmatpush2.msra.mxu0 0.0
    %320 = vmatprep.subr.mxu0 0.0
    %321 = vmatpush2.msra.mxu0 0.0
    %322 = vmatprep.subr.mxu0 0.0
    %323 = vmatpush2.msra.mxu0 0.0
    %324 = vmatprep.subr.mxu0 0.0
    %325 = vmatpush2.msra.mxu0 0.0
    %326 = vmatprep.subr.mxu0 0.0
    %327 = vmatpush2.msra.mxu0 0.0
    %328 = vmatprep.subr.mxu0 0.0
    %329 = vmatpush2.msra.mxu0 0.0
    %330 = vmatprep.subr.mxu0 0.0
    %331 = vmatpush2.msra.mxu0 0.0
    %332 = vmatprep.subr.mxu0 0.0
    %333 = vmatpush2.msra.mxu0 0.0
    %334 = vmatprep.subr.mxu0 0.0
    %335 = vmatpush2.msra.mxu0 0.0
    %336 = vmatprep.subr.mxu0 0.0
    %337 = vmatpush2.msra.mxu0 0.0
    %338 = vmatprep.subr.mxu0 0.0
    %339 = vmatpush2.msra.mxu0 0.0
    %340 = vmatprep.subr.mxu0 0.0
    %341 = vmatpush2.msra.mxu0 0.0
    %342 = vmatprep.subr.mxu0 0.0
    %343 = vmatpush2.msra.mxu0 0.0
    %344 = vmatprep.subr.mxu0 0.0
    %345 = vmatpush2.msra.mxu0 0.0
    %346 = vmatprep.mubr.f32.mxu0 0.0
    %347 = vmatmul.mubr.f32.gmra.mxu0 %v280
    %v348 = vpop.f32.mrf.mxu0
    %v349 = vadd.f32 0.0, %v348
    %v350 = vpop.f32.mrf.mxu0
    %351 = vdwg.mxu0
    %v352 = vadd.f32 %v278, %v349
    %v353 = vtanh.pop %v352
    %354 = vst.msk [vmem:[#allocation2 + $0x3] sm:$0x1] %vm122, %v353
    %v355 = vld [vmem:[#allocation2 + $0x4] sm:$0x1]
    %v357 = vsel %vm43, %v353, 0
    %359 = vmatprep.subr.mxu0 0.0
    %360 = vmatpush1.msra.mxu0 0.0
    %361 = vmatprep.subr.mxu0 0.0
    %362 = vmatpush1.msra.mxu0 0.0
    %363 = vmatprep.subr.mxu0 0.0
    %364 = vmatpush1.msra.mxu0 0.0
    %365 = vmatprep.subr.mxu0 0.0
    %366 = vmatpush1.msra.mxu0 0.0
    %367 = vmatprep.subr.mxu0 0.0
    %368 = vmatpush1.msra.mxu0 0.0
    %369 = vmatprep.subr.mxu0 0.0
    %370 = vmatpush1.msra.mxu0 0.0
    %371 = vmatprep.subr.mxu0 0.0
    %372 = vmatpush1.msra.mxu0 0.0
    %373 = vmatprep.subr.mxu0 0.0
    %374 = vmatpush1.msra.mxu0 0.0
    %375 = vmatprep.subr.mxu0 0.0
    %376 = vmatpush1.msra.mxu0 0.0
    %377 = vmatprep.subr.mxu0 0.0
    %378 = vmatpush1.msra.mxu0 0.0
    %379 = vmatprep.subr.mxu0 0.0
    %380 = vmatpush1.msra.mxu0 0.0
    %381 = vmatprep.subr.mxu0 0.0
    %382 = vmatpush1.msra.mxu0 0.0
    %383 = vmatprep.subr.mxu0 0.0
    %384 = vmatpush1.msra.mxu0 0.0
    %385 = vmatprep.subr.mxu0 0.0
    %386 = vmatpush1.msra.mxu0 0.0
    %387 = vmatprep.subr.mxu0 0.0
    %388 = vmatpush1.msra.mxu0 %v23
    %389 = vmatprep.subr.mxu0 0.0
    %390 = vmatpush1.msra.mxu0 %v22
    %391 = vmatprep.subr.mxu0 0.0
    %392 = vmatpush2.msra.mxu0 0.0
    %393 = vmatprep.subr.mxu0 0.0
    %394 = vmatpush2.msra.mxu0 0.0
    %395 = vmatprep.subr.mxu0 0.0
    %396 = vmatpush2.msra.mxu0 0.0
    %397 = vmatprep.subr.mxu0 0.0
    %398 = vmatpush2.msra.mxu0 0.0
    %399 = vmatprep.subr.mxu0 0.0
    %400 = vmatpush2.msra.mxu0 0.0
    %401 = vmatprep.subr.mxu0 0.0
    %402 = vmatpush2.msra.mxu0 0.0
    %403 = vmatprep.subr.mxu0 0.0
    %404 = vmatpush2.msra.mxu0 0.0
    %405 = vmatprep.subr.mxu0 0.0
    %406 = vmatpush2.msra.mxu0 0.0
    %407 = vmatprep.subr.mxu0 0.0
    %408 = vmatpush2.msra.mxu0 0.0
    %409 = vmatprep.subr.mxu0 0.0
    %410 = vmatpush2.msra.mxu0 0.0
    %411 = vmatprep.subr.mxu0 0.0
    %412 = vmatpush2.msra.mxu0 0.0
    %413 = vmatprep.subr.mxu0 0.0
    %414 = vmatpush2.msra.mxu0 0.0
    %415 = vmatprep.subr.mxu0 0.0
    %416 = vmatpush2.msra.mxu0 0.0
    %417 = vmatprep.subr.mxu0 0.0
    %418 = vmatpush2.msra.mxu0 0.0
    %419 = vmatprep.subr.mxu0 0.0
    %420 = vmatpush2.msra.mxu0 0.0
    %421 = vmatprep.subr.mxu0 0.0
    %422 = vmatpush2.msra.mxu0 0.0
    %423 = vmatprep.mubr.f32.mxu0 0.0
    %424 = vmatmul.mubr.f32.gmra.mxu0 %v357
    %v425 = vpop.f32.mrf.mxu0
    %v426 = vadd.f32 0.0, %v425
    %v427 = vpop.f32.mrf.mxu0
    %428 = vdwg.mxu0
    %v429 = vadd.f32 %v355, %v426
    %v430 = vtanh.pop %v429
    %431 = vst.msk [vmem:[#allocation2 + $0x4] sm:$0x1] %vm122, %v430
    %v432 = vld [vmem:[#allocation2 + $0x5] sm:$0x1]
    %v434 = vsel %vm43, %v430, 0
    %436 = vmatprep.subr.mxu0 0.0
    %437 = vmatpush1.msra.mxu0 0.0
    %438 = vmatprep.subr.mxu0 0.0
    %439 = vmatpush1.msra.mxu0 0.0
    %440 = vmatprep.subr.mxu0 0.0
    %441 = vmatpush1.msra.mxu0 0.0
    %442 = vmatprep.subr.mxu0 0.0
    %443 = vmatpush1.msra.mxu0 0.0
    %444 = vmatprep.subr.mxu0 0.0
    %445 = vmatpush1.msra.mxu0 0.0
    %446 = vmatprep.subr.mxu0 0.0
    %447 = vmatpush1.msra.mxu0 0.0
    %448 = vmatprep.subr.mxu0 0.0
    %449 = vmatpush1.msra.mxu0 0.0
    %450 = vmatprep.subr.mxu0 0.0
    %451 = vmatpush1.msra.mxu0 0.0
    %452 = vmatprep.subr.mxu0 0.0
    %453 = vmatpush1.msra.mxu0 0.0
    %454 = vmatprep.subr.mxu0 0.0
    %455 = vmatpush1.msra.mxu0 0.0
    %456 = vmatprep.subr.mxu0 0.0
    %457 = vmatpush1.msra.mxu0 0.0
    %458 = vmatprep.subr.mxu0 0.0
    %459 = vmatpush1.msra.mxu0 0.0
    %460 = vmatprep.subr.mxu0 0.0
    %461 = vmatpush1.msra.mxu0 0.0
    %462 = vmatprep.subr.mxu0 0.0
    %463 = vmatpush1.msra.mxu0 0.0
    %464 = vmatprep.subr.mxu0 0.0
    %465 = vmatpush1.msra.mxu0 %v23
    %466 = vmatprep.subr.mxu0 0.0
    %467 = vmatpush1.msra.mxu0 %v22
    %468 = vmatprep.subr.mxu0 0.0
    %469 = vmatpush2.msra.mxu0 0.0
    %470 = vmatprep.subr.mxu0 0.0
    %471 = vmatpush2.msra.mxu0 0.0
    %472 = vmatprep.subr.mxu0 0.0
    %473 = vmatpush2.msra.mxu0 0.0
    %474 = vmatprep.subr.mxu0 0.0
    %475 = vmatpush2.msra.mxu0 0.0
    %476 = vmatprep.subr.mxu0 0.0
    %477 = vmatpush2.msra.mxu0 0.0
    %478 = vmatprep.subr.mxu0 0.0
    %479 = vmatpush2.msra.mxu0 0.0
    %480 = vmatprep.subr.mxu0 0.0
    %481 = vmatpush2.msra.mxu0 0.0
    %482 = vmatprep.subr.mxu0 0.0
    %483 = vmatpush2.msra.mxu0 0.0
    %484 = vmatprep.subr.mxu0 0.0
    %485 = vmatpush2.msra.mxu0 0.0
    %486 = vmatprep.subr.mxu0 0.0
    %487 = vmatpush2.msra.mxu0 0.0
    %488 = vmatprep.subr.mxu0 0.0
    %489 = vmatpush2.msra.mxu0 0.0
    %490 = vmatprep.subr.mxu0 0.0
    %491 = vmatpush2.msra.mxu0 0.0
    %492 = vmatprep.subr.mxu0 0.0
    %493 = vmatpush2.msra.mxu0 0.0
    %494 = vmatprep.subr.mxu0 0.0
    %495 = vmatpush2.msra.mxu0 0.0
    %496 = vmatprep.subr.mxu0 0.0
    %497 = vmatpush2.msra.mxu0 0.0
    %498 = vmatprep.subr.mxu0 0.0
    %499 = vmatpush2.msra.mxu0 0.0
    %500 = vmatprep.mubr.f32.mxu0 0.0
    %501 = vmatmul.mubr.f32.gmra.mxu0 %v434
    %v502 = vpop.f32.mrf.mxu0
    %v503 = vadd.f32 0.0, %v502
    %v504 = vpop.f32.mrf.mxu0
    %505 = vdwg.mxu0
    %v506 = vadd.f32 %v432, %v503
    %v507 = vtanh.pop %v506
    %508 = vst.msk [vmem:[#allocation2 + $0x5] sm:$0x1] %vm122, %v507
    %v509 = vld [vmem:[#allocation2 + $0x6] sm:$0x1]
    %v511 = vsel %vm43, %v507, 0
    %513 = vmatprep.subr.mxu0 0.0
    %514 = vmatpush1.msra.mxu0 0.0
    %515 = vmatprep.subr.mxu0 0.0
    %516 = vmatpush1.msra.mxu0 0.0
    %517 = vmatprep.subr.mxu0 0.0
    %518 = vmatpush1.msra.mxu0 0.0
    %519 = vmatprep.subr.mxu0 0.0
    %520 = vmatpush1.msra.mxu0 0.0
    %521 = vmatprep.subr.mxu0 0.0
    %522 = vmatpush1.msra.mxu0 0.0
    %523 = vmatprep.subr.mxu0 0.0
    %524 = vmatpush1.msra.mxu0 0.0
    %525 = vmatprep.subr.mxu0 0.0
    %526 = vmatpush1.msra.mxu0 0.0
    %527 = vmatprep.subr.mxu0 0.0
    %528 = vmatpush1.msra.mxu0 0.0
    %529 = vmatprep.subr.mxu0 0.0
    %530 = vmatpush1.msra.mxu0 0.0
    %531 = vmatprep.subr.mxu0 0.0
    %532 = vmatpush1.msra.mxu0 0.0
    %533 = vmatprep.subr.mxu0 0.0
    %534 = vmatpush1.msra.mxu0 0.0
    %535 = vmatprep.subr.mxu0 0.0
    %536 = vmatpush1.msra.mxu0 0.0
    %537 = vmatprep.subr.mxu0 0.0
    %538 = vmatpush1.msra.mxu0 0.0
    %539 = vmatprep.subr.mxu0 0.0
    %540 = vmatpush1.msra.mxu0 0.0
    %541 = vmatprep.subr.mxu0 0.0
    %542 = vmatpush1.msra.mxu0 %v23
    %543 = vmatprep.subr.mxu0 0.0
    %544 = vmatpush1.msra.mxu0 %v22
    %545 = vmatprep.subr.mxu0 0.0
    %546 = vmatpush2.msra.mxu0 0.0
    %547 = vmatprep.subr.mxu0 0.0
    %548 = vmatpush2.msra.mxu0 0.0
    %549 = vmatprep.subr.mxu0 0.0
    %550 = vmatpush2.msra.mxu0 0.0
    %551 = vmatprep.subr.mxu0 0.0
    %552 = vmatpush2.msra.mxu0 0.0
    %553 = vmatprep.subr.mxu0 0.0
    %554 = vmatpush2.msra.mxu0 0.0
    %555 = vmatprep.subr.mxu0 0.0
    %556 = vmatpush2.msra.mxu0 0.0
    %557 = vmatprep.subr.mxu0 0.0
    %558 = vmatpush2.msra.mxu0 0.0
    %559 = vmatprep.subr.mxu0 0.0
    %560 = vmatpush2.msra.mxu0 0.0
    %561 = vmatprep.subr.mxu0 0.0
    %562 = vmatpush2.msra.mxu0 0.0
    %563 = vmatprep.subr.mxu0 0.0
    %564 = vmatpush2.msra.mxu0 0.0
    %565 = vmatprep.subr.mxu0 0.0
    %566 = vmatpush2.msra.mxu0 0.0
    %567 = vmatprep.subr.mxu0 0.0
    %568 = vmatpush2.msra.mxu0 0.0
    %569 = vmatprep.subr.mxu0 0.0
    %570 = vmatpush2.msra.mxu0 0.0
    %571 = vmatprep.subr.mxu0 0.0
    %572 = vmatpush2.msra.mxu0 0.0
    %573 = vmatprep.subr.mxu0 0.0
    %574 = vmatpush2.msra.mxu0 0.0
    %575 = vmatprep.subr.mxu0 0.0
    %576 = vmatpush2.msra.mxu0 0.0
    %577 = vmatprep.mubr.f32.mxu0 0.0
    %578 = vmatmul.mubr.f32.gmra.mxu0 %v511
    %v579 = vpop.f32.mrf.mxu0
    %v580 = vadd.f32 0.0, %v579
    %v581 = vpop.f32.mrf.mxu0
    %582 = vdwg.mxu0
    %v583 = vadd.f32 %v509, %v580
    %v584 = vtanh.pop %v583
    %585 = vst.msk [vmem:[#allocation2 + $0x6] sm:$0x1] %vm122, %v584
    %v586 = vld [vmem:[#allocation2 + $0x7] sm:$0x1]
    %v588 = vsel %vm43, %v584, 0
    %590 = vmatprep.subr.mxu0 0.0
    %591 = vmatpush1.msra.mxu0 0.0
    %592 = vmatprep.subr.mxu0 0.0
    %593 = vmatpush1.msra.mxu0 0.0
    %594 = vmatprep.subr.mxu0 0.0
    %595 = vmatpush1.msra.mxu0 0.0
    %596 = vmatprep.subr.mxu0 0.0
    %597 = vmatpush1.msra.mxu0 0.0
    %598 = vmatprep.subr.mxu0 0.0
    %599 = vmatpush1.msra.mxu0 0.0
    %600 = vmatprep.subr.mxu0 0.0
    %601 = vmatpush1.msra.mxu0 0.0
    %602 = vmatprep.subr.mxu0 0.0
    %603 = vmatpush1.msra.mxu0 0.0
    %604 = vmatprep.subr.mxu0 0.0
    %605 = vmatpush1.msra.mxu0 0.0
    %606 = vmatprep.subr.mxu0 0.0
    %607 = vmatpush1.msra.mxu0 0.0
    %608 = vmatprep.subr.mxu0 0.0
    %609 = vmatpush1.msra.mxu0 0.0
    %610 = vmatprep.subr.mxu0 0.0
    %611 = vmatpush1.msra.mxu0 0.0
    %612 = vmatprep.subr.mxu0 0.0
    %613 = vmatpush1.msra.mxu0 0.0
    %614 = vmatprep.subr.mxu0 0.0
    %615 = vmatpush1.msra.mxu0 0.0
    %616 = vmatprep.subr.mxu0 0.0
    %617 = vmatpush1.msra.mxu0 0.0
    %618 = vmatprep.subr.mxu0 0.0
    %619 = vmatpush1.msra.mxu0 %v23
    %620 = vmatprep.subr.mxu0 0.0
    %621 = vmatpush1.msra.mxu0 %v22
    %622 = vmatprep.subr.mxu0 0.0
    %623 = vmatpush2.msra.mxu0 0.0
    %624 = vmatprep.subr.mxu0 0.0
    %625 = vmatpush2.msra.mxu0 0.0
    %626 = vmatprep.subr.mxu0 0.0
    %627 = vmatpush2.msra.mxu0 0.0
    %628 = vmatprep.subr.mxu0 0.0
    %629 = vmatpush2.msra.mxu0 0.0
    %630 = vmatprep.subr.mxu0 0.0
    %631 = vmatpush2.msra.mxu0 0.0
    %632 = vmatprep.subr.mxu0 0.0
    %633 = vmatpush2.msra.mxu0 0.0
    %634 = vmatprep.subr.mxu0 0.0
    %635 = vmatpush2.msra.mxu0 0.0
    %636 = vmatprep.subr.mxu0 0.0
    %637 = vmatpush2.msra.mxu0 0.0
    %638 = vmatprep.subr.mxu0 0.0
    %639 = vmatpush2.msra.mxu0 0.0
    %640 = vmatprep.subr.mxu0 0.0
    %641 = vmatpush2.msra.mxu0 0.0
    %642 = vmatprep.subr.mxu0 0.0
    %643 = vmatpush2.msra.mxu0 0.0
    %644 = vmatprep.subr.mxu0 0.0
    %645 = vmatpush2.msra.mxu0 0.0
    %646 = vmatprep.subr.mxu0 0.0
    %647 = vmatpush2.msra.mxu0 0.0
    %648 = vmatprep.subr.mxu0 0.0
    %649 = vmatpush2.msra.mxu0 0.0
    %650 = vmatprep.subr.mxu0 0.0
    %651 = vmatpush2.msra.mxu0 0.0
    %652 = vmatprep.subr.mxu0 0.0
    %653 = vmatpush2.msra.mxu0 0.0
    %654 = vmatprep.mubr.f32.mxu0 0.0
    %655 = vmatmul.mubr.f32.gmra.mxu0 %v588
    %v656 = vpop.f32.mrf.mxu0
    %v657 = vadd.f32 0.0, %v656
    %v658 = vpop.f32.mrf.mxu0
    %659 = vdwg.mxu0
    %v660 = vadd.f32 %v586, %v657
    %v661 = vtanh.pop %v660
    %662 = vst.msk [vmem:[#allocation2 + $0x7] sm:$0x1] %vm122, %v661
    %663 = vst.msk [vmem:[#allocation6] sm:$0x1] %vm122, %v661
    %v664 = vld [vmem:[#allocation2] sm:$0xff]
    %s665 = sld [smem:[#allocation3]]
    %v666 = vstv %s665
    %v668 = vsel %vm43, %v26, 0
    %v671 = vsel %vm43, %v664, 0
    %673 = vmatprep.subr.mxu0 0.0
    %674 = vmatpush1.xpose.msra.mxu0 0.0
    %675 = vmatprep.subr.mxu0 0.0
    %676 = vmatpush1.xpose.msra.mxu0 0.0
    %677 = vmatprep.subr.mxu0 0.0
    %678 = vmatpush1.xpose.msra.mxu0 0.0
    %679 = vmatprep.subr.mxu0 0.0
    %680 = vmatpush1.xpose.msra.mxu0 0.0
    %681 = vmatprep.subr.mxu0 0.0
    %682 = vmatpush1.xpose.msra.mxu0 0.0
    %683 = vmatprep.subr.mxu0 0.0
    %684 = vmatpush1.xpose.msra.mxu0 0.0
    %685 = vmatprep.subr.mxu0 0.0
    %686 = vmatpush1.xpose.msra.mxu0 0.0
    %687 = vmatprep.subr.mxu0 0.0
    %688 = vmatpush1.xpose.msra.mxu0 0.0
    %689 = vmatprep.subr.mxu0 0.0
    %690 = vmatpush1.xpose.msra.mxu0 0.0
    %691 = vmatprep.subr.mxu0 0.0
    %692 = vmatpush1.xpose.msra.mxu0 0.0
    %693 = vmatprep.subr.mxu0 0.0
    %694 = vmatpush1.xpose.msra.mxu0 0.0
    %695 = vmatprep.subr.mxu0 0.0
    %696 = vmatpush1.xpose.msra.mxu0 0.0
    %697 = vmatprep.subr.mxu0 0.0
    %698 = vmatpush1.xpose.msra.mxu0 0.0
    %699 = vmatprep.subr.mxu0 0.0
    %700 = vmatpush1.xpose.msra.mxu0 0.0
    %701 = vmatprep.subr.mxu0 0.0
    %702 = vmatpush1.xpose.msra.mxu0 0.0
    %703 = vmatprep.subr.mxu0 0.0
    %704 = vmatpush1.xpose.msra.mxu0 %v671
    %705 = vmatprep.subr.mxu0 0.0
    %706 = vmatpush2.xpose.msra.mxu0 0.0
    %707 = vmatprep.subr.mxu0 0.0
    %708 = vmatpush2.xpose.msra.mxu0 0.0
    %709 = vmatprep.subr.mxu0 0.0
    %710 = vmatpush2.xpose.msra.mxu0 0.0
    %711 = vmatprep.subr.mxu0 0.0
    %712 = vmatpush2.xpose.msra.mxu0 0.0
    %713 = vmatprep.subr.mxu0 0.0
    %714 = vmatpush2.xpose.msra.mxu0 0.0
    %715 = vmatprep.subr.mxu0 0.0
    %716 = vmatpush2.xpose.msra.mxu0 0.0
    %717 = vmatprep.subr.mxu0 0.0
    %718 = vmatpush2.xpose.msra.mxu0 0.0
    %719 = vmatprep.subr.mxu0 0.0
    %720 = vmatpush2.xpose.msra.mxu0 0.0
    %721 = vmatprep.subr.mxu0 0.0
    %722 = vmatpush2.xpose.msra.mxu0 0.0
    %723 = vmatprep.subr.mxu0 0.0
    %724 = vmatpush2.xpose.msra.mxu0 0.0
    %725 = vmatprep.subr.mxu0 0.0
    %726 = vmatpush2.xpose.msra.mxu0 0.0
    %727 = vmatprep.subr.mxu0 0.0
    %728 = vmatpush2.xpose.msra.mxu0 0.0
    %729 = vmatprep.subr.mxu0 0.0
    %730 = vmatpush2.xpose.msra.mxu0 0.0
    %731 = vmatprep.subr.mxu0 0.0
    %732 = vmatpush2.xpose.msra.mxu0 0.0
    %733 = vmatprep.subr.mxu0 0.0
    %734 = vmatpush2.xpose.msra.mxu0 0.0
    %735 = vmatprep.subr.mxu0 0.0
    %736 = vmatpush2.xpose.msra.mxu0 0.0
    %737 = vmatprep.mubr.f32.mxu0 0.0
    %738 = vmatmul.mubr.f32.gmra.mxu0 %v668
    %v739 = vpop.f32.mrf.mxu0
    %v740 = vadd.f32 %v666, %v739
    %v741 = vpop.f32.mrf.mxu0
    %742 = vdwg.mxu0
    %vm743 = vcmask 57344
    %744 = vst.msk [vmem:[#allocation4] sm:$0x1] %vm743, %v740
    // Predicated region
    $region18: #{tpu_custom_call.1} parent=1 // pred_check
      _
    $region19: #{tpu_custom_call.1} parent=1 // pred_check_branch
      %746 = sbr.rel (0) target = $region21
    $region20: #{tpu_custom_call.1} parent=1 // pred_region
      %s748 = ssub.s32 16, 16
      %749 = vsyncadd [#allocation5], %s748
      %s751 = sshll.u32 [#allocation4], 4
      %s752 = int_to_ptr.vmem [resolvable:$true] %s751
      %754 = dma.vmem_to_hbm [thread:$0]  %s752, 16, %s4, [#allocation5]
    $region21: #{tpu_custom_call.1} parent=1 // pred_fallthru
      _
    // Predicated region
    $region22: #{tpu_custom_call.1} parent=1 // pred_check
      _
    $region23: #{tpu_custom_call.1} parent=1 // pred_check_branch
      %756 = sbr.rel (0) target = $region25
    $region24: #{tpu_custom_call.1} parent=1 // pred_region
      %s758 = ssub.s32 16, 16
      %759 = vsyncadd [#allocation7], %s758
      %s761 = sshll.u32 [#allocation6], 4
      %s762 = int_to_ptr.vmem [resolvable:$true] %s761
      %764 = dma.vmem_to_hbm [thread:$0]  %s762, 16, %s5, [#allocation7]
    $region25: #{tpu_custom_call.1} parent=1 // pred_fallthru
      _
    // Predicated region
    $region26: #{tpu_custom_call.1} parent=1 // pred_check
      _
    $region27: #{tpu_custom_call.1} parent=1 // pred_check_branch
      %766 = sbr.rel (0) target = $region29
    $region28: #{tpu_custom_call.1} parent=1 // pred_region
      %767 = dma.done [#allocation5], 16
    $region29: #{tpu_custom_call.1} parent=1 // pred_fallthru
      _
    // Predicated region
    $region30: #{tpu_custom_call.1} parent=1 // pred_check
      _
    $region31: #{tpu_custom_call.1} parent=1 // pred_check_branch
      %769 = sbr.rel (0) target = $region33
    $region32: #{tpu_custom_call.1} parent=1 // pred_region
      %770 = dma.done [#allocation7], 16
    $region33: #{tpu_custom_call.1} parent=1 // pred_fallthru
      _
    %771 = vsyncpa [#allocation5], 1
    %772 = vsyncpa [#allocation7], 1

</llo_original>
